<compile_context>
chip_gen: v7x
topology: tpu7x:2x2x1
jax: 0.10.0
libtpu: 0.0.40
codegen_flags: <defaults>
</compile_context>

<pallas_src>
import functools

import jax
import jax.numpy as jnp
import numpy as np
from jax.experimental import pallas as pl
from jax.experimental.pallas import tpu as pltpu

# Conservative working-set budget so the same tile choice pipelines cleanly on
# v5e (16 MiB scoped default), v6e (32 MiB) and v7x (64 MiB physical).
_VMEM_BUDGET_BYTES = 24 * 1024 * 1024
_VMEM_LIMIT_BYTES = 32 * 1024 * 1024


def _round_up(x, m):
    return ((x + m - 1) // m) * m


def _simple_linear_kernel(x_ref, w_ref, b_ref, *rest, activate, resnet):
    # x_ref: [TM, K], w_ref: [K, Np], b_ref: [1, Np],
    # (idt_ref: [1, Np] only when resnet), o_ref: [TM, Np]
    o_ref = rest[-1]
    h = jnp.dot(x_ref[...], w_ref[...], preferred_element_type=jnp.float32)
    h = h + b_ref[...]                 # broadcast [1, Np] over rows
    if activate:
        h = jnp.tanh(h)
    if resnet:
        idt_ref = rest[0]
        h = h * idt_ref[...]           # broadcast [1, Np] over rows
    o_ref[...] = h.astype(o_ref.dtype)


def simple_linear_forward(x, matrix, bias, idt=None, *, activate=True):
    """Pallas TPU implementation of SimpleLinear.forward.

    x:      [batch, num_in]
    matrix: [num_in, num_out]
    bias:   [1, num_out]
    idt:    [1, num_out] or None (None => use_timestep=False)
    """
    batch, num_in = x.shape
    num_in_w, num_out = matrix.shape
    assert num_in == num_in_w
    resnet = idt is not None
    out_dtype = x.dtype

    # ---- Lane-dense output: pad feature axis to a multiple of 128 ----------
    n_p = _round_up(num_out, 128)
    if n_p != num_out:
        pad_n = n_p - num_out
        matrix = jnp.pad(matrix, ((0, 0), (0, pad_n)))
        bias = jnp.pad(bias, ((0, 0), (0, pad_n)))
        if resnet:
            idt = jnp.pad(idt, ((0, 0), (0, pad_n)))

    # ---- Pick the largest batch tile that fits the VMEM budget -------------
    itemsize = 4  # f32 path through the kernel
    # Resident (constant index_map, but BlockSpec still double-buffers): W, b, idt.
    resident = 2 * itemsize * (num_in * n_p + n_p * (2 if resnet else 1))
    tm_cap = 8
    for cand in (2048, 1024, 512, 256, 128, 64, 32, 16, 8):
        ws = resident + 2 * itemsize * cand * (num_in + n_p)  # streamed x + out
        if ws <= _VMEM_BUDGET_BYTES:
            tm_cap = cand
            break
    # Don't blow tiny batches up to the cap; keep tm a multiple of 8 sublanes.
    tm = min(tm_cap, _round_up(batch, 8))

    # ---- Ragged batch: pad rows to a tile multiple (no divisibility assert) --
    batch_p = _round_up(batch, tm)
    if batch_p != batch:
        x = jnp.pad(x, ((0, batch_p - batch), (0, 0)))
    grid = (batch_p // tm,)

    kernel = functools.partial(_simple_linear_kernel, activate=activate, resnet=resnet)

    in_specs = [
        pl.BlockSpec((tm, num_in), lambda i: (i, 0)),       # x tile (streams)
        pl.BlockSpec((num_in, n_p), lambda i: (0, 0)),      # W (resident)
        pl.BlockSpec((1, n_p), lambda i: (0, 0)),           # bias (resident)
    ]
    args = [x, matrix, bias]
    if resnet:
        in_specs.append(pl.BlockSpec((1, n_p), lambda i: (0, 0)))  # idt (resident)
        args.append(idt)

    out = pl.pallas_call(
        kernel,
        out_shape=jax.ShapeDtypeStruct((batch_p, n_p), out_dtype),
        grid_spec=pltpu.PrefetchScalarGridSpec(
            num_scalar_prefetch=0,
            grid=grid,
            in_specs=in_specs,
            out_specs=pl.BlockSpec((tm, n_p), lambda i: (i, 0)),
        ),
        compiler_params=pltpu.CompilerParams(
            dimension_semantics=("parallel",),
            vmem_limit_bytes=_VMEM_LIMIT_BYTES,
        ),
    )(*args)

    # Slice off the batch / feature padding.
    return out[:batch, :num_out]


def init_simple_linear_params(key, num_in, num_out, bavg=0.0, stddev=1.0,
                              use_timestep=False, dtype=jnp.float32):
    """Deterministic parameter init mirroring SimpleLinear.__init__ shapes/stats."""
    k_w, k_b, k_i = jax.random.split(key, 3)
    matrix = jax.random.normal(k_w, (num_in, num_out), dtype=dtype) * (
        stddev / np.sqrt(num_out + num_in)
    )
    bias = bavg + stddev * jax.random.normal(k_b, (1, num_out), dtype=dtype)
    idt = None
    if use_timestep:
        idt = 0.1 + 0.001 * jax.random.normal(k_i, (1, num_out), dtype=dtype)
    return matrix, bias, idt


if __name__ == "__main__":
    key = jax.random.PRNGKey(0)
    k_x, k_p = jax.random.split(key)

    batch, num_in, num_out = 8, 32, 64
    x = jax.random.normal(k_x, (batch, num_in), dtype=jnp.float32)

    # Case 1: use_timestep=True, activate=True (exercises every branch of forward()).
    matrix, bias, idt = init_simple_linear_params(
        k_p, num_in, num_out, bavg=0.0, stddev=1.0, use_timestep=True
    )
    out = simple_linear_forward(x, matrix, bias, idt, activate=True)
    out = jax.block_until_ready(out)
    ref = jnp.tanh(x @ matrix + bias) * idt
    np.testing.assert_allclose(np.asarray(out), np.asarray(ref), rtol=1e-5, atol=1e-5)

    # Case 2: resnet=False path (no idt operand at all), activate=True.
    out2 = simple_linear_forward(x, matrix, bias, None, activate=True)
    out2 = jax.block_until_ready(out2)
    ref2 = jnp.tanh(x @ matrix + bias)
    np.testing.assert_allclose(np.asarray(out2), np.asarray(ref2), rtol=1e-5, atol=1e-5)

    # Case 3: ragged batch (not a multiple of the tile) to exercise row padding.
    batch3 = 13
    x3 = jax.random.normal(k_x, (batch3, num_in), dtype=jnp.float32)
    out3 = simple_linear_forward(x3, matrix, bias, idt, activate=True)
    out3 = jax.block_until_ready(out3)
    ref3 = jnp.tanh(x3 @ matrix + bias) * idt
    np.testing.assert_allclose(np.asarray(out3), np.asarray(ref3), rtol=1e-5, atol=1e-5)

    print("KERNEL_OK")
</pallas_src>

<mosaic_0001>
module attributes {stable_mosaic.version = 11 : i64} {
  func.func @_simple_linear_kernel(%arg0: i32, %arg1: memref<8x32xf32, #tpu.memory_space<vmem>>, %arg2: memref<32x128xf32, #tpu.memory_space<vmem>>, %arg3: memref<1x128xf32, #tpu.memory_space<vmem>>, %arg4: memref<1x128xf32, #tpu.memory_space<vmem>>, %arg5: memref<8x128xf32, #tpu.memory_space<vmem>>) attributes {dimension_semantics = [#tpu.dimension_semantics<parallel>], iteration_bounds = array<i64: 1>, scalar_prefetch = 0 : i64, scratch_operands = 0 : i64, tpu.core_type = #tpu.core_type<tc>, window_params = [{transform_indices = @transform_0, window_bounds = array<i64: 8, 32>}, {pipeline_mode = #tpu.pipeline_mode<synchronous>, transform_indices = @transform_1, window_bounds = array<i64: 32, 128>}, {pipeline_mode = #tpu.pipeline_mode<synchronous>, transform_indices = @transform_2, window_bounds = array<i64: 1, 128>}, {pipeline_mode = #tpu.pipeline_mode<synchronous>, transform_indices = @transform_3, window_bounds = array<i64: 1, 128>}, {transform_indices = @transform_4, window_bounds = array<i64: 8, 128>}]} {
    %c0 = arith.constant 0 : index
    %c0_0 = arith.constant 0 : index
    %0 = vector.load %arg1[%c0, %c0_0] : memref<8x32xf32, #tpu.memory_space<vmem>>, vector<8x32xf32>
    %c0_1 = arith.constant 0 : index
    %c0_2 = arith.constant 0 : index
    %1 = vector.load %arg2[%c0_1, %c0_2] : memref<32x128xf32, #tpu.memory_space<vmem>>, vector<32x128xf32>
    %cst = arith.constant dense<0.000000e+00> : vector<8x128xf32>
    %2 = tpu.matmul %0, %1, %cst {dimension_numbers = #tpu.dot_dimension_numbers<[1], [0], [0], [1], [0, 0, 1, 1], [], []>} : vector<8x32xf32>, vector<32x128xf32>, vector<8x128xf32> -> vector<8x128xf32>
    %c0_3 = arith.constant 0 : index
    %c0_4 = arith.constant 0 : index
    %3 = vector.load %arg3[%c0_3, %c0_4] : memref<1x128xf32, #tpu.memory_space<vmem>>, vector<1x128xf32>
    %4 = vector.broadcast %3 : vector<1x128xf32> to vector<8x128xf32>
    %5 = arith.addf %2, %4 : vector<8x128xf32>
    %6 = math.tanh %5 : vector<8x128xf32>
    %c0_5 = arith.constant 0 : index
    %c0_6 = arith.constant 0 : index
    %7 = vector.load %arg4[%c0_5, %c0_6] : memref<1x128xf32, #tpu.memory_space<vmem>>, vector<1x128xf32>
    %8 = vector.broadcast %7 : vector<1x128xf32> to vector<8x128xf32>
    %9 = arith.mulf %6, %8 : vector<8x128xf32>
    %c0_7 = arith.constant 0 : index
    %c0_8 = arith.constant 0 : index
    %10 = vector.load %arg5[%c0_7, %c0_8] : memref<8x128xf32, #tpu.memory_space<vmem>>, vector<8x128xf32>
    tpu.vector_store %arg5[%c0_7, %c0_8], %9 {strides = array<i32>} : memref<8x128xf32, #tpu.memory_space<vmem>>, vector<8x128xf32>,
    return
  }
  func.func @transform_0(%arg0: i32) -> (i32, i32) {
    %c0_i32 = arith.constant 0 : i32
    %c0_i32_0 = arith.constant 0 : i32
    return %arg0, %c0_i32 : i32, i32
  }
  func.func @transform_1(%arg0: i32) -> (i32, i32) {
    %c0_i32 = arith.constant 0 : i32
    %c0_i32_0 = arith.constant 0 : i32
    %c0_i32_1 = arith.constant 0 : i32
    return %c0_i32, %c0_i32_0 : i32, i32
  }
  func.func @transform_2(%arg0: i32) -> (i32, i32) {
    %c0_i32 = arith.constant 0 : i32
    %c0_i32_0 = arith.constant 0 : i32
    %c0_i32_1 = arith.constant 0 : i32
    return %c0_i32, %c0_i32_0 : i32, i32
  }
  func.func @transform_3(%arg0: i32) -> (i32, i32) {
    %c0_i32 = arith.constant 0 : i32
    %c0_i32_0 = arith.constant 0 : i32
    %c0_i32_1 = arith.constant 0 : i32
    return %c0_i32, %c0_i32_0 : i32, i32
  }
  func.func @transform_4(%arg0: i32) -> (i32, i32) {
    %c0_i32 = arith.constant 0 : i32
    %c0_i32_0 = arith.constant 0 : i32
    return %arg0, %c0_i32 : i32, i32
  }
}

</mosaic_0001>

<llo_original>
// kernel: tpu_custom_call.1
$region0: #{tpu_custom_call.1}
  #allocation0 [shape = 'u32[]', space=smem, size = 0x4, offset = 0x4, fixed_abs, tag = 'smem constant byte address 0x4 - core index']
  #allocation1 [shape = 'u32[144,128]{1,0:T(1,128)}', space=vmem, size = 0x12000, scoped, tag = 'internal scratch']
  %s0 = inlined_call_operand.hbm [shape: f32[8,32], index: 0, kind: input, shape index: {}]
  %s1 = inlined_call_operand.hbm [shape: f32[32,128], index: 1, kind: input, shape index: {}]
  %s2 = inlined_call_operand.vmem [shape: f32[1,128], index: 2, kind: input, shape index: {}]
  %s3 = inlined_call_operand.vmem [shape: f32[1,128], index: 3, kind: input, shape index: {}]
  %s4 = inlined_call_operand.hbm [shape: f32[8,128], index: 4, kind: output, shape index: {}]
  %s5 = sld [smem:[#allocation0]]
  $region34: #{tpu_custom_call.1} parent=0
    _
  %s7 = ssub.s32 1, %s5
  %s8 = scalar_select 0, %s7, %s5
  $region1: #{tpu_custom_call.1} parent=0
    #allocation2 [shape = 'u8[4096]{0}', space=vmem, size = 0x1000, scoped, tag = 'input window, operand 0, single buffered']
    #allocation3 [shape = 's32[1]{0}', space=sflag, size = 0x4, scoped, tag = 'scoped memory for tpu_custom_call.1']
    #allocation4 [shape = 's32[1]{0}', space=sflag, size = 0x4, scoped, tag = 'scoped memory for tpu_custom_call.1']
    #allocation5 [shape = 'u8[16384]{0}', space=vmem, size = 0x4000, scoped, tag = 'input window, operand 1, single buffered']
    #allocation6 [shape = 's32[1]{0}', space=sflag, size = 0x4, scoped, tag = 'scoped memory for tpu_custom_call.1']
    #allocation7 [shape = 'u8[4096]{0}', space=vmem, size = 0x1000, scoped, tag = 'output window, operand 0, single buffered']
    %9 = vsyncpa [#allocation3], 0
    %10 = vsyncpa [#allocation6], 0
    %11 = vsyncpa [#allocation4], 0
    // Predicated region
    $region2: #{tpu_custom_call.1} parent=1 // pred_check
      _
    $region3: #{tpu_custom_call.1} parent=1 // pred_check_branch
      %13 = sbr.rel (0) target = $region5
    $region4: #{tpu_custom_call.1} parent=1 // pred_region
      %s15 = ssub.s32 128, 128
      %16 = vsyncadd [#allocation3], %s15
      %s18 = sshll.u32 [#allocation2], 4
      %s19 = int_to_ptr.vmem [resolvable:$true] %s18
      %21 = dma.hbm_to_vmem [thread:$0]  %s0, 128, %s19, [#allocation3]
    $region5: #{tpu_custom_call.1} parent=1 // pred_fallthru
      _
    // Predicated region
    $region6: #{tpu_custom_call.1} parent=1 // pred_check
      _
    $region7: #{tpu_custom_call.1} parent=1 // pred_check_branch
      %23 = sbr.rel (0) target = $region9
    $region8: #{tpu_custom_call.1} parent=1 // pred_region
      %s25 = ssub.s32 512, 512
      %26 = vsyncadd [#allocation6], %s25
      %s27 = sshll.u32 [#allocation5], 4
      %s28 = int_to_ptr.vmem [resolvable:$true] %s27
      %33 = dma.hbm_to_vmem [thread:$0]  %s1, 512, %s28, [#allocation6], 128, 128, 8
    $region9: #{tpu_custom_call.1} parent=1 // pred_fallthru
      _
    // Predicated region
    $region10: #{tpu_custom_call.1} parent=1 // pred_check
      _
    $region11: #{tpu_custom_call.1} parent=1 // pred_check_branch
      %35 = sbr.rel (0) target = $region13
    $region12: #{tpu_custom_call.1} parent=1 // pred_region
      _
    $region13: #{tpu_custom_call.1} parent=1 // pred_fallthru
      _
    // Predicated region
    $region14: #{tpu_custom_call.1} parent=1 // pred_check
      _
    $region15: #{tpu_custom_call.1} parent=1 // pred_check_branch
      %37 = sbr.rel (0) target = $region17
    $region16: #{tpu_custom_call.1} parent=1 // pred_region
      _
    $region17: #{tpu_custom_call.1} parent=1 // pred_fallthru
      _
    // Predicated region
    $region18: #{tpu_custom_call.1} parent=1 // pred_check
      _
    $region19: #{tpu_custom_call.1} parent=1 // pred_check_branch
      %39 = sbr.rel (0) target = $region21
    $region20: #{tpu_custom_call.1} parent=1 // pred_region
      %40 = dma.done [#allocation3], 128
    $region21: #{tpu_custom_call.1} parent=1 // pred_fallthru
      _
    // Predicated region
    $region22: #{tpu_custom_call.1} parent=1 // pred_check
      _
    $region23: #{tpu_custom_call.1} parent=1 // pred_check_branch
      %42 = sbr.rel (0) target = $region25
    $region24: #{tpu_custom_call.1} parent=1 // pred_region
      %43 = dma.done [#allocation6], 512
    $region25: #{tpu_custom_call.1} parent=1 // pred_fallthru
      _
    %v44 = vld [vmem:[#allocation2] sm:$0xff]
    %v45 = vld [vmem:[#allocation5] sm:$0xff]
    %v46 = vld [vmem:[#allocation5 + $0x8] sm:$0xff]
    %v47 = vld [vmem:[#allocation5 + $0x10] sm:$0xff]
    %v48 = vld [vmem:[#allocation5 + $0x18] sm:$0xff]
    %v49 = vld [vmem:[%s2] sm:$0x1]
    %v51 = vlaneseq
    %v52 = vshrl.u32 %v51, 7
    %v53 = vsub.s32 0, %v52
    %v54 = vrot.slane %v49, %v53
    %vm56 = vcmask 261120
    %v58 = vsel %vm56, %v44, 0
    %60 = vmatprep.subr.mxu0 0.0
    %61 = vmatpush1.msra.mxu0 %v45
    %62 = vmatprep.subr.mxu0 0.0
    %63 = vmatpush1.msra.mxu0 %v46
    %64 = vmatprep.subr.mxu0 0.0
    %65 = vmatpush1.msra.mxu0 %v47
    %66 = vmatprep.subr.mxu0 0.0
    %67 = vmatpush1.msra.mxu0 %v48
    %68 = vmatprep.subr.mxu0 0.0
    %69 = vmatpush1.msra.mxu0 0.0
    %70 = vmatprep.subr.mxu0 0.0
    %71 = vmatpush1.msra.mxu0 0.0
    %72 = vmatprep.subr.mxu0 0.0
    %73 = vmatpush1.msra.mxu0 0.0
    %74 = vmatprep.subr.mxu0 0.0
    %75 = vmatpush1.msra.mxu0 0.0
    %76 = vmatprep.subr.mxu0 0.0
    %77 = vmatpush1.msra.mxu0 0.0
    %78 = vmatprep.subr.mxu0 0.0
    %79 = vmatpush1.msra.mxu0 0.0
    %80 = vmatprep.subr.mxu0 0.0
    %81 = vmatpush1.msra.mxu0 0.0
    %82 = vmatprep.subr.mxu0 0.0
    %83 = vmatpush1.msra.mxu0 0.0
    %84 = vmatprep.subr.mxu0 0.0
    %85 = vmatpush1.msra.mxu0 0.0
    %86 = vmatprep.subr.mxu0 0.0
    %87 = vmatpush1.msra.mxu0 0.0
    %88 = vmatprep.subr.mxu0 0.0
    %89 = vmatpush1.msra.mxu0 0.0
    %90 = vmatprep.subr.mxu0 0.0
    %91 = vmatpush1.msra.mxu0 0.0
    %92 = vmatprep.subr.mxu0 0.0
    %93 = vmatpush1.msra.mxu0 0.0
    %94 = vmatprep.subr.mxu0 0.0
    %95 = vmatpush1.msra.mxu0 0.0
    %96 = vmatprep.subr.mxu0 0.0
    %97 = vmatpush1.msra.mxu0 0.0
    %98 = vmatprep.subr.mxu0 0.0
    %99 = vmatpush1.msra.mxu0 0.0
    %100 = vmatprep.subr.mxu0 0.0
    %101 = vmatpush1.msra.mxu0 0.0
    %102 = vmatprep.subr.mxu0 0.0
    %103 = vmatpush1.msra.mxu0 0.0
    %104 = vmatprep.subr.mxu0 0.0
    %105 = vmatpush1.msra.mxu0 0.0
    %106 = vmatprep.subr.mxu0 0.0
    %107 = vmatpush1.msra.mxu0 0.0
    %108 = vmatprep.subr.mxu0 0.0
    %109 = vmatpush1.msra.mxu0 0.0
    %110 = vmatprep.subr.mxu0 0.0
    %111 = vmatpush1.msra.mxu0 0.0
    %112 = vmatprep.subr.mxu0 0.0
    %113 = vmatpush1.msra.mxu0 0.0
    %114 = vmatprep.subr.mxu0 0.0
    %115 = vmatpush1.msra.mxu0 0.0
    %116 = vmatprep.subr.mxu0 0.0
    %117 = vmatpush1.msra.mxu0 0.0
    %118 = vmatprep.subr.mxu0 0.0
    %119 = vmatpush1.msra.mxu0 0.0
    %120 = vmatprep.subr.mxu0 0.0
    %121 = vmatpush1.msra.mxu0 0.0
    %122 = vmatprep.subr.mxu0 0.0
    %123 = vmatpush1.msra.mxu0 0.0
    %124 = vmatprep.mubr.f32.mxu0 0.0
    %125 = vmatmul.mubr.f32.gmra.mrb[0].mxu0 %v58
    %v126 = vpop.f32.mrb[0].mxu0
    %v127 = vadd.f32 %v54, %v126
    %v128 = vpop.f32.mrb[0].mxu0
    %129 = vdwg.mxu0
    %v130 = vtanh.pop %v127
    %v131 = vld [vmem:[%s3] sm:$0x1]
    %v133 = vlaneseq
    %v134 = vshrl.u32 %v133, 7
    %v135 = vsub.s32 0, %v134
    %v136 = vrot.slane %v131, %v135
    %v138 = vmul.f32 %v130, %v136
    %139 = vst [vmem:[#allocation7] sm:$0xff] %v138
    // Predicated region
    $region26: #{tpu_custom_call.1} parent=1 // pred_check
      _
    $region27: #{tpu_custom_call.1} parent=1 // pred_check_branch
      %141 = sbr.rel (0) target = $region29
    $region28: #{tpu_custom_call.1} parent=1 // pred_region
      %s143 = ssub.s32 128, 128
      %144 = vsyncadd [#allocation4], %s143
      %s146 = sshll.u32 [#allocation7], 4
      %s147 = int_to_ptr.vmem [resolvable:$true] %s146
      %149 = dma.vmem_to_hbm [thread:$0]  %s147, 128, %s4, [#allocation4]
    $region29: #{tpu_custom_call.1} parent=1 // pred_fallthru
      _
    // Predicated region
    $region30: #{tpu_custom_call.1} parent=1 // pred_check
      _
    $region31: #{tpu_custom_call.1} parent=1 // pred_check_branch
      %151 = sbr.rel (0) target = $region33
    $region32: #{tpu_custom_call.1} parent=1 // pred_region
      %152 = dma.done [#allocation4], 128
    $region33: #{tpu_custom_call.1} parent=1 // pred_fallthru
      _
    %153 = vsyncpa [#allocation3], 1
    %154 = vsyncpa [#allocation6], 1
    %155 = vsyncpa [#allocation4], 1

</llo_original>
